<compile_context>
chip_gen: v7x
topology: tpu7x:2x2x1
jax: 0.10.0
libtpu: 0.0.40
codegen_flags: <defaults>
</compile_context>

<pallas_src>
import functools
import math

import jax
import jax.numpy as jnp
from jax.experimental import pallas as pl
from jax.experimental.pallas import tpu as pltpu

LANE = 128


def _round_up(x, m):
    return ((x + m - 1) // m) * m


def _vmem_capacity_bytes():
    """Physical VMEM per core; conservative (v7x = 64 MiB) if query fails."""
    try:
        return int(pltpu.get_tpu_info().vmem_capacity_bytes)
    except Exception:
        return 64 << 20


def _default_block_n(hp):
    """Largest 128-multiple divisor of Hp that (a) keeps the fused weight block
    a few MiB and (b) leaves >=2 hidden tiles when Hp >= 256 so both v7x
    TensorCores get work at small batch."""
    cap = LANE if hp < 2 * LANE else min(512, hp // 2)
    best = LANE
    c = LANE
    while c <= min(hp, cap):
        if hp % c == 0:
            best = c
        c += LANE
    return best


def _pick_tk(dp, hp, cap_elems):
    """Largest 128-multiple divisor of gcd(Dp, Hp) not exceeding cap_elems.

    tk must divide Dp exactly so the x/h boundary of the concatenated K axis
    falls on a k-tile boundary (required by the i_n / h_n routing).
    """
    g = math.gcd(dp, hp)
    best = LANE
    c = LANE
    while c <= min(g, cap_elems):
        if g % c == 0:
            best = c
        c += LANE
    return best


def prepare_gru_params(w_ih, w_hh, b_ih, b_hh, block_n=None):
    """One-time parameter packing (call at init time, NOT per step).

    w_ih: (3H, D), w_hh: (3H, H), b_ih/b_hh: (3H,)

    Produces:
      wc   : (Dp+Hp, 3*Hp) bf16, gate-interleaved along N with granularity bn:
             columns [j*3*bn : (j+1)*3*bn] hold [W_r | W_z | W_n] (transposed,
             K = [x-rows ; h-rows]) for hidden columns [j*bn, (j+1)*bn).
             => the kernel's (tk, 3*tn) weight block supports ONE fused dot.
      bias : (8, Hp) f32, rows = [b_ir+b_hr, b_iz+b_hz, b_in, b_hn, 0, 0, 0, 0]
    """
    three_h, D = w_ih.shape
    H = three_h // 3
    Dp = _round_up(D, LANE)
    Hp = _round_up(H, LANE)
    bn = block_n if block_n is not None else _default_block_n(Hp)
    assert Hp % bn == 0 and bn % LANE == 0
    nh = Hp // bn

    w_ih_g = w_ih.reshape(3, H, D).astype(jnp.float32)
    w_hh_g = w_hh.reshape(3, H, H).astype(jnp.float32)

    # (gate, K, Hp) with K = [x rows | h rows], zero-padded.
    wg = jnp.zeros((3, Dp + Hp, Hp), jnp.float32)
    wg = wg.at[:, :D, :H].set(jnp.transpose(w_ih_g, (0, 2, 1)))
    wg = wg.at[:, Dp:Dp + H, :H].set(jnp.transpose(w_hh_g, (0, 2, 1)))
    # Gate-interleave along N with granularity bn:
    #   (3, K, nh, bn) -> (K, nh, 3, bn) -> (K, 3*Hp)
    wg = wg.reshape(3, Dp + Hp, nh, bn)
    wc = jnp.transpose(wg, (1, 2, 0, 3)).reshape(Dp + Hp, 3 * Hp)
    wc = wc.astype(jnp.bfloat16)

    b_ih_g = b_ih.reshape(3, H).astype(jnp.float32)
    b_hh_g = b_hh.reshape(3, H).astype(jnp.float32)
    bias = jnp.zeros((8, Hp), jnp.float32)                # 8 rows: sublane-aligned
    bias = bias.at[0, :H].set(b_ih_g[0] + b_hh_g[0])      # r (biases foldable)
    bias = bias.at[1, :H].set(b_ih_g[1] + b_hh_g[1])      # z
    bias = bias.at[2, :H].set(b_ih_g[2])                  # i_n (must stay separate)
    bias = bias.at[3, :H].set(b_hh_g[2])                  # h_n (multiplied by r)

    return dict(wc=wc, bias=bias, D=D, H=H, Dp=Dp, Hp=Hp, bn=bn)


def _gru_kernel(xh_ref, h_ref, wc_ref, bias_ref, o_ref,
                acc_r, acc_z, acc_in, acc_hn, *, nkd, tn):
    ik = pl.program_id(2)

    # One fused MXU contraction for all three gates of this hidden tile.
    g = jnp.dot(xh_ref[...], wc_ref[...], preferred_element_type=jnp.float32)
    gr = g[:, 0 * tn:1 * tn]          # lane-aligned static slices
    gz = g[:, 1 * tn:2 * tn]
    gn = g[:, 2 * tn:3 * tn]

    # Initialize accumulators with the first partial (no zero-then-add).
    @pl.when(ik == 0)
    def _():
        acc_r[...] = gr
        acc_z[...] = gz
        acc_in[...] = gn

    @pl.when(ik > 0)
    def _():
        acc_r[...] += gr
        acc_z[...] += gz

    # n-gate: x-region partials go to i_n, h-region partials to h_n so that
    # r * (W_hn h + b_hn) keeps exact GRU semantics.  tk divides Dp, so the
    # x/h boundary is always a k-tile boundary.
    @pl.when(jnp.logical_and(ik > 0, ik < nkd))
    def _():
        acc_in[...] += gn

    @pl.when(ik == nkd)
    def _():
        acc_hn[...] = gn

    @pl.when(ik > nkd)
    def _():
        acc_hn[...] += gn

    @pl.when(ik == pl.num_programs(2) - 1)
    def _():
        b = bias_ref[...]                                   # (8, tn) f32
        r = jax.nn.sigmoid(acc_r[...] + b[0:1, :])
        z = jax.nn.sigmoid(acc_z[...] + b[1:2, :])
        n = jnp.tanh(acc_in[...] + b[2:3, :] + r * (acc_hn[...] + b[3:4, :]))
        h_prev = h_ref[...]                                 # f32 blend precision
        o_ref[...] = ((1.0 - z) * n + z * h_prev).astype(o_ref.dtype)


def gru_cell_v2(x, h, params):
    """Pallas GRUCellV2.forward: x (B, D), h (B, H) -> h_t (B, H)."""
    D, H, Dp, Hp = params["D"], params["H"], params["Dp"], params["Hp"]
    tn = params["bn"]
    B = x.shape[0]
    Kp = Dp + Hp
    out_dtype = x.dtype
    out_itemsize = jnp.dtype(out_dtype).itemsize

    vmem_cap = _vmem_capacity_bytes()

    # ---- batch tiling (big tm shrinks nb: weights re-stream once per b-tile)
    tm_cap = 512 if vmem_cap >= (96 << 20) else 256          # v5e/v6e vs v7x
    Bp = _round_up(max(B, 16), 16)
    tm = min(tm_cap, Bp)
    Bp = _round_up(Bp, tm)
    nb, nh = Bp // tm, Hp // tn

    # ---- VMEM budget -> tk cap (double-buffered weight+xh blocks dominate)
    budget = min(vmem_cap // 4, 32 << 20)
    fixed = (2 * tm * tn * 4                # h blend block (f32, 2 buffers)
             + 2 * tm * tn * out_itemsize   # output block (2 buffers)
             + 4 * tm * tn * 4              # f32 accumulators
             + 2 * 8 * tn * 4)              # bias block
    per_tk = 2 * (3 * tn) * 2 + 2 * tm * 2  # weights + xh, bf16, 2 buffers
    tk_cap = ((budget - fixed) // per_tk // LANE) * LANE
    tk_cap = max(LANE, min(2048, tk_cap))
    tk = _pick_tk(Dp, Hp, tk_cap)
    nk = Kp // tk
    nkd = Dp // tk                           # k-tiles belonging to the x region

    # ---- activation packing (bf16 halves the stream; small vs weights)
    xh = jnp.zeros((Bp, Kp), jnp.bfloat16)
    xh = xh.at[:B, :D].set(x.astype(jnp.bfloat16))
    xh = xh.at[:B, Dp:Dp + H].set(h.astype(jnp.bfloat16))
    # f32 copy of h for the output blend (kept separate for precision).
    h_pad = jnp.zeros((Bp, Hp), jnp.float32).at[:B, :H].set(h.astype(jnp.float32))

    wc, bias = params["wc"], params["bias"]
    cost = pl.CostEstimate(
        flops=2 * Bp * Kp * 3 * Hp,
        transcendentals=3 * Bp * Hp,
        bytes_accessed=int(nb * wc.size * 2          # weights re-stream per b-tile
                           + nh * Bp * Kp * 2        # xh re-streams per h-tile
                           + Bp * Hp * 4             # h blend
                           + nb * bias.size * 4
                           + Bp * Hp * out_itemsize),
    )

    vmem_limit = int(min(2 * budget, (vmem_cap * 3) // 4))

    out = pl.pallas_call(
        functools.partial(_gru_kernel, nkd=nkd, tn=tn),
        out_shape=jax.ShapeDtypeStruct((Bp, Hp), out_dtype),
        grid_spec=pltpu.PrefetchScalarGridSpec(
            num_scalar_prefetch=0,
            grid=(nb, nh, nk),
            in_specs=[
                pl.BlockSpec((tm, tk), lambda ib, ih, ik: (ib, ik)),      # xh (bf16)
                pl.BlockSpec((tm, tn), lambda ib, ih, ik: (ib, ih)),      # h_prev (f32)
                pl.BlockSpec((tk, 3 * tn), lambda ib, ih, ik: (ik, ih)),  # fused gate weights
                pl.BlockSpec((8, tn), lambda ib, ih, ik: (0, ih)),        # biases
            ],
            out_specs=pl.BlockSpec((tm, tn), lambda ib, ih, ik: (ib, ih)),
            scratch_shapes=[pltpu.VMEM((tm, tn), jnp.float32)] * 4,
        ),
        compiler_params=pltpu.CompilerParams(
            dimension_semantics=("parallel", "parallel", "arbitrary"),
            vmem_limit_bytes=vmem_limit),
        cost_estimate=cost,
    )(xh, h_pad, wc, bias)

    return out[:B, :H]


def _init_params(key, input_size, hidden_size, dtype=jnp.float32):
    """Deterministic init mirroring the PyTorch module: U(-K, K), K = 1/sqrt(H)."""
    K = 1.0 / math.sqrt(hidden_size)
    k1, k2, k3, k4 = jax.random.split(key, 4)
    w_ih = jax.random.uniform(k1, (3 * hidden_size, input_size), dtype, -K, K)
    w_hh = jax.random.uniform(k2, (3 * hidden_size, hidden_size), dtype, -K, K)
    b_ih = jax.random.uniform(k3, (3 * hidden_size,), dtype, -K, K)
    b_hh = jax.random.uniform(k4, (3 * hidden_size,), dtype, -K, K)
    return w_ih, w_hh, b_ih, b_hh


def _reference(x, h, w_ih, w_hh, b_ih, b_hh):
    """Pure-JAX f32 reference reproducing the PyTorch forward exactly."""
    H = h.shape[1]
    gi = x @ w_ih.T + b_ih[None, :]
    gh = h @ w_hh.T + b_hh[None, :]
    i_r, i_z, i_n = gi[:, :H], gi[:, H:2 * H], gi[:, 2 * H:]
    h_r, h_z, h_n = gh[:, :H], gh[:, H:2 * H], gh[:, 2 * H:]
    r = jax.nn.sigmoid(i_r + h_r)
    z = jax.nn.sigmoid(i_z + h_z)
    n = jnp.tanh(i_n + r * h_n)
    return (1.0 - z) * n + z * h


if __name__ == "__main__":
    key = jax.random.PRNGKey(0)
    kp, kx, kh = jax.random.split(key, 3)

    B, input_size, hidden_size = 2, 16, 32
    w_ih, w_hh, b_ih, b_hh = _init_params(kp, input_size, hidden_size)
    x = jax.random.normal(kx, (B, input_size), jnp.float32)
    h = jax.random.normal(kh, (B, hidden_size), jnp.float32)

    params = prepare_gru_params(w_ih, w_hh, b_ih, b_hh)   # one-time packing
    h_t = gru_cell_v2(x, h, params)
    jax.block_until_ready(h_t)

    ref = _reference(x, h, w_ih, w_hh, b_ih, b_hh)
    assert h_t.shape == (B, hidden_size)
    # bf16 matmul operands with f32 accumulation -> relaxed tolerance.
    assert jnp.allclose(h_t, ref, atol=2e-2, rtol=2e-2), "mismatch vs reference"

    print("KERNEL_OK")
</pallas_src>

<mosaic_0001>
module attributes {stable_mosaic.version = 11 : i64} {
  func.func @_gru_kernel(%arg0: i32, %arg1: i32, %arg2: i32, %arg3: memref<16x128xbf16, #tpu.memory_space<vmem>>, %arg4: memref<16x128xf32, #tpu.memory_space<vmem>>, %arg5: memref<128x384xbf16, #tpu.memory_space<vmem>>, %arg6: memref<8x128xf32, #tpu.memory_space<vmem>>, %arg7: memref<16x128xf32, #tpu.memory_space<vmem>>, %arg8: memref<16x128xf32, #tpu.memory_space<vmem>>, %arg9: memref<16x128xf32, #tpu.memory_space<vmem>>, %arg10: memref<16x128xf32, #tpu.memory_space<vmem>>, %arg11: memref<16x128xf32, #tpu.memory_space<vmem>>) attributes {dimension_semantics = [#tpu.dimension_semantics<parallel>, #tpu.dimension_semantics<parallel>, #tpu.dimension_semantics<arbitrary>], iteration_bounds = array<i64: 1, 1, 2>, scalar_prefetch = 0 : i64, scratch_operands = 4 : i64, tpu.core_type = #tpu.core_type<tc>, window_params = [{transform_indices = @transform_0, window_bounds = array<i64: 16, 128>}, {transform_indices = @transform_1, window_bounds = array<i64: 16, 128>}, {transform_indices = @transform_2, window_bounds = array<i64: 128, 384>}, {transform_indices = @transform_3, window_bounds = array<i64: 8, 128>}, {transform_indices = @transform_4, window_bounds = array<i64: 16, 128>}]} {
    %c0 = arith.constant 0 : index
    %c0_0 = arith.constant 0 : index
    %0 = vector.load %arg3[%c0, %c0_0] : memref<16x128xbf16, #tpu.memory_space<vmem>>, vector<16x128xbf16>
    %c0_1 = arith.constant 0 : index
    %c0_2 = arith.constant 0 : index
    %1 = vector.load %arg5[%c0_1, %c0_2] : memref<128x384xbf16, #tpu.memory_space<vmem>>, vector<128x384xbf16>
    %cst = arith.constant dense<0.000000e+00> : vector<16x384xf32>
    %2 = tpu.matmul %0, %1, %cst {dimension_numbers = #tpu.dot_dimension_numbers<[1], [0], [0], [1], [0, 0, 1, 1], [], []>} : vector<16x128xbf16>, vector<128x384xbf16>, vector<16x384xf32> -> vector<16x384xf32>
    %3 = vector.extract_strided_slice %2 {offsets = [0, 0], sizes = [16, 128], strides = [1, 1]} : vector<16x384xf32> to vector<16x128xf32>
    %4 = vector.extract_strided_slice %2 {offsets = [0, 128], sizes = [16, 128], strides = [1, 1]} : vector<16x384xf32> to vector<16x128xf32>
    %5 = vector.extract_strided_slice %2 {offsets = [0, 256], sizes = [16, 128], strides = [1, 1]} : vector<16x384xf32> to vector<16x128xf32>
    %c0_i32 = arith.constant 0 : i32
    %6 = arith.cmpi eq, %arg2, %c0_i32 : i32
    %7 = arith.extui %6 : i1 to i32
    %c0_i32_3 = arith.constant 0 : i32
    %8 = arith.cmpi ne, %7, %c0_i32_3 : i32
    scf.if %8 {
      %c0_14 = arith.constant 0 : index
      %c0_15 = arith.constant 0 : index
      %26 = vector.load %arg8[%c0_14, %c0_15] : memref<16x128xf32, #tpu.memory_space<vmem>>, vector<16x128xf32>
      tpu.vector_store %arg8[%c0_14, %c0_15], %3 {strides = array<i32>} : memref<16x128xf32, #tpu.memory_space<vmem>>, vector<16x128xf32>,
      %c0_16 = arith.constant 0 : index
      %c0_17 = arith.constant 0 : index
      %27 = vector.load %arg9[%c0_16, %c0_17] : memref<16x128xf32, #tpu.memory_space<vmem>>, vector<16x128xf32>
      tpu.vector_store %arg9[%c0_16, %c0_17], %4 {strides = array<i32>} : memref<16x128xf32, #tpu.memory_space<vmem>>, vector<16x128xf32>,
      %c0_18 = arith.constant 0 : index
      %c0_19 = arith.constant 0 : index
      %28 = vector.load %arg10[%c0_18, %c0_19] : memref<16x128xf32, #tpu.memory_space<vmem>>, vector<16x128xf32>
      tpu.vector_store %arg10[%c0_18, %c0_19], %5 {strides = array<i32>} : memref<16x128xf32, #tpu.memory_space<vmem>>, vector<16x128xf32>,
    } else {
    }
    %c0_i32_4 = arith.constant 0 : i32
    %9 = arith.cmpi sgt, %arg2, %c0_i32_4 : i32
    %10 = arith.extui %9 : i1 to i32
    %c0_i32_5 = arith.constant 0 : i32
    %11 = arith.cmpi ne, %10, %c0_i32_5 : i32
    scf.if %11 {
      %c0_14 = arith.constant 0 : index
      %c0_15 = arith.constant 0 : index
      %26 = vector.load %arg8[%c0_14, %c0_15] : memref<16x128xf32, #tpu.memory_space<vmem>>, vector<16x128xf32>
      %27 = arith.addf %26, %3 : vector<16x128xf32>
      %c0_16 = arith.constant 0 : index
      %c0_17 = arith.constant 0 : index
      %28 = vector.load %arg8[%c0_16, %c0_17] : memref<16x128xf32, #tpu.memory_space<vmem>>, vector<16x128xf32>
      tpu.vector_store %arg8[%c0_16, %c0_17], %27 {strides = array<i32>} : memref<16x128xf32, #tpu.memory_space<vmem>>, vector<16x128xf32>,
      %c0_18 = arith.constant 0 : index
      %c0_19 = arith.constant 0 : index
      %29 = vector.load %arg9[%c0_18, %c0_19] : memref<16x128xf32, #tpu.memory_space<vmem>>, vector<16x128xf32>
      %30 = arith.addf %29, %4 : vector<16x128xf32>
      %c0_20 = arith.constant 0 : index
      %c0_21 = arith.constant 0 : index
      %31 = vector.load %arg9[%c0_20, %c0_21] : memref<16x128xf32, #tpu.memory_space<vmem>>, vector<16x128xf32>
      tpu.vector_store %arg9[%c0_20, %c0_21], %30 {strides = array<i32>} : memref<16x128xf32, #tpu.memory_space<vmem>>, vector<16x128xf32>,
    } else {
    }
    %c0_i32_6 = arith.constant 0 : i32
    %12 = arith.cmpi sgt, %arg2, %c0_i32_6 : i32
    %c1_i32 = arith.constant 1 : i32
    %13 = arith.cmpi slt, %arg2, %c1_i32 : i32
    %14 = arith.andi %12, %13 : i1
    %15 = arith.extui %14 : i1 to i32
    %c0_i32_7 = arith.constant 0 : i32
    %16 = arith.cmpi ne, %15, %c0_i32_7 : i32
    scf.if %16 {
      %c0_14 = arith.constant 0 : index
      %c0_15 = arith.constant 0 : index
      %26 = vector.load %arg10[%c0_14, %c0_15] : memref<16x128xf32, #tpu.memory_space<vmem>>, vector<16x128xf32>
      %27 = arith.addf %26, %5 : vector<16x128xf32>
      %c0_16 = arith.constant 0 : index
      %c0_17 = arith.constant 0 : index
      %28 = vector.load %arg10[%c0_16, %c0_17] : memref<16x128xf32, #tpu.memory_space<vmem>>, vector<16x128xf32>
      tpu.vector_store %arg10[%c0_16, %c0_17], %27 {strides = array<i32>} : memref<16x128xf32, #tpu.memory_space<vmem>>, vector<16x128xf32>,
    } else {
    }
    %c1_i32_8 = arith.constant 1 : i32
    %17 = arith.cmpi eq, %arg2, %c1_i32_8 : i32
    %18 = arith.extui %17 : i1 to i32
    %c0_i32_9 = arith.constant 0 : i32
    %19 = arith.cmpi ne, %18, %c0_i32_9 : i32
    scf.if %19 {
      %c0_14 = arith.constant 0 : index
      %c0_15 = arith.constant 0 : index
      %26 = vector.load %arg11[%c0_14, %c0_15] : memref<16x128xf32, #tpu.memory_space<vmem>>, vector<16x128xf32>
      tpu.vector_store %arg11[%c0_14, %c0_15], %5 {strides = array<i32>} : memref<16x128xf32, #tpu.memory_space<vmem>>, vector<16x128xf32>,
    } else {
    }
    %c1_i32_10 = arith.constant 1 : i32
    %20 = arith.cmpi sgt, %arg2, %c1_i32_10 : i32
    %21 = arith.extui %20 : i1 to i32
    %c0_i32_11 = arith.constant 0 : i32
    %22 = arith.cmpi ne, %21, %c0_i32_11 : i32
    scf.if %22 {
      %c0_14 = arith.constant 0 : index
      %c0_15 = arith.constant 0 : index
      %26 = vector.load %arg11[%c0_14, %c0_15] : memref<16x128xf32, #tpu.memory_space<vmem>>, vector<16x128xf32>
      %27 = arith.addf %26, %5 : vector<16x128xf32>
      %c0_16 = arith.constant 0 : index
      %c0_17 = arith.constant 0 : index
      %28 = vector.load %arg11[%c0_16, %c0_17] : memref<16x128xf32, #tpu.memory_space<vmem>>, vector<16x128xf32>
      tpu.vector_store %arg11[%c0_16, %c0_17], %27 {strides = array<i32>} : memref<16x128xf32, #tpu.memory_space<vmem>>, vector<16x128xf32>,
    } else {
    }
    %c1_i32_12 = arith.constant 1 : i32
    %23 = arith.cmpi eq, %arg2, %c1_i32_12 : i32
    %24 = arith.extui %23 : i1 to i32
    %c0_i32_13 = arith.constant 0 : i32
    %25 = arith.cmpi ne, %24, %c0_i32_13 : i32
    scf.if %25 {
      %c0_14 = arith.constant 0 : index
      %c0_15 = arith.constant 0 : index
      %26 = vector.load %arg6[%c0_14, %c0_15] : memref<8x128xf32, #tpu.memory_space<vmem>>, vector<8x128xf32>
      %c0_16 = arith.constant 0 : index
      %c0_17 = arith.constant 0 : index
      %27 = vector.load %arg8[%c0_16, %c0_17] : memref<16x128xf32, #tpu.memory_space<vmem>>, vector<16x128xf32>
      %28 = vector.extract_strided_slice %26 {offsets = [0, 0], sizes = [1, 128], strides = [1, 1]} : vector<8x128xf32> to vector<1x128xf32>
      %29 = vector.broadcast %28 : vector<1x128xf32> to vector<16x128xf32>
      %30 = arith.addf %27, %29 : vector<16x128xf32>
      %31 = arith.negf %30 : vector<16x128xf32>
      %32 = math.exp %31 : vector<16x128xf32>
      %cst_18 = arith.constant 1.000000e+00 : f32
      %33 = vector.broadcast %cst_18 : f32 to vector<16x128xf32>
      %34 = arith.addf %33, %32 : vector<16x128xf32>
      %35 = arith.divf %33, %34 : vector<16x128xf32>
      %c0_19 = arith.constant 0 : index
      %c0_20 = arith.constant 0 : index
      %36 = vector.load %arg9[%c0_19, %c0_20] : memref<16x128xf32, #tpu.memory_space<vmem>>, vector<16x128xf32>
      %37 = vector.extract_strided_slice %26 {offsets = [1, 0], sizes = [1, 128], strides = [1, 1]} : vector<8x128xf32> to vector<1x128xf32>
      %38 = vector.broadcast %37 : vector<1x128xf32> to vector<16x128xf32>
      %39 = arith.addf %36, %38 : vector<16x128xf32>
      %40 = arith.negf %39 : vector<16x128xf32>
      %41 = math.exp %40 : vector<16x128xf32>
      %cst_21 = arith.constant 1.000000e+00 : f32
      %42 = vector.broadcast %cst_21 : f32 to vector<16x128xf32>
      %43 = arith.addf %42, %41 : vector<16x128xf32>
      %44 = arith.divf %42, %43 : vector<16x128xf32>
      %c0_22 = arith.constant 0 : index
      %c0_23 = arith.constant 0 : index
      %45 = vector.load %arg10[%c0_22, %c0_23] : memref<16x128xf32, #tpu.memory_space<vmem>>, vector<16x128xf32>
      %46 = vector.extract_strided_slice %26 {offsets = [2, 0], sizes = [1, 128], strides = [1, 1]} : vector<8x128xf32> to vector<1x128xf32>
      %47 = vector.broadcast %46 : vector<1x128xf32> to vector<16x128xf32>
      %48 = arith.addf %45, %47 : vector<16x128xf32>
      %c0_24 = arith.constant 0 : index
      %c0_25 = arith.constant 0 : index
      %49 = vector.load %arg11[%c0_24, %c0_25] : memref<16x128xf32, #tpu.memory_space<vmem>>, vector<16x128xf32>
      %50 = vector.extract_strided_slice %26 {offsets = [3, 0], sizes = [1, 128], strides = [1, 1]} : vector<8x128xf32> to vector<1x128xf32>
      %51 = vector.broadcast %50 : vector<1x128xf32> to vector<16x128xf32>
      %52 = arith.addf %49, %51 : vector<16x128xf32>
      %53 = arith.mulf %35, %52 : vector<16x128xf32>
      %54 = arith.addf %48, %53 : vector<16x128xf32>
      %55 = math.tanh %54 : vector<16x128xf32>
      %c0_26 = arith.constant 0 : index
      %c0_27 = arith.constant 0 : index
      %56 = vector.load %arg4[%c0_26, %c0_27] : memref<16x128xf32, #tpu.memory_space<vmem>>, vector<16x128xf32>
      %cst_28 = arith.constant 1.000000e+00 : f32
      %57 = vector.broadcast %cst_28 : f32 to vector<16x128xf32>
      %58 = arith.subf %57, %44 : vector<16x128xf32>
      %59 = arith.mulf %58, %55 : vector<16x128xf32>
      %60 = arith.mulf %44, %56 : vector<16x128xf32>
      %61 = arith.addf %59, %60 : vector<16x128xf32>
      %c0_29 = arith.constant 0 : index
      %c0_30 = arith.constant 0 : index
      %62 = vector.load %arg7[%c0_29, %c0_30] : memref<16x128xf32, #tpu.memory_space<vmem>>, vector<16x128xf32>
      tpu.vector_store %arg7[%c0_29, %c0_30], %61 {strides = array<i32>} : memref<16x128xf32, #tpu.memory_space<vmem>>, vector<16x128xf32>,
    } else {
    }
    return
  }
  func.func @transform_0(%arg0: i32, %arg1: i32, %arg2: i32) -> (i32, i32) {
    %c0_i32 = arith.constant 0 : i32
    return %arg0, %arg2 : i32, i32
  }
  func.func @transform_1(%arg0: i32, %arg1: i32, %arg2: i32) -> (i32, i32) {
    %c0_i32 = arith.constant 0 : i32
    return %arg0, %arg1 : i32, i32
  }
  func.func @transform_2(%arg0: i32, %arg1: i32, %arg2: i32) -> (i32, i32) {
    %c0_i32 = arith.constant 0 : i32
    return %arg2, %arg1 : i32, i32
  }
  func.func @transform_3(%arg0: i32, %arg1: i32, %arg2: i32) -> (i32, i32) {
    %c0_i32 = arith.constant 0 : i32
    %c0_i32_0 = arith.constant 0 : i32
    return %c0_i32, %arg1 : i32, i32
  }
  func.func @transform_4(%arg0: i32, %arg1: i32, %arg2: i32) -> (i32, i32) {
    %c0_i32 = arith.constant 0 : i32
    return %arg0, %arg1 : i32, i32
  }
}

</mosaic_0001>

<llo_original>
// kernel: tpu_custom_call.1
$region0: #{tpu_custom_call.1}
  #allocation0 [shape = 'u32[]', space=smem, size = 0x4, offset = 0x4, fixed_abs, tag = 'smem constant byte address 0x4 - core index']
  #allocation1 [shape = 'u32[144,128]{1,0:T(1,128)}', space=vmem, size = 0x12000, scoped, tag = 'internal scratch']
  #allocation2 [shape = 'f32[16,128]{1,0:T(8,128)}', space=vmem, size = 0x2000, scoped, tag = 'scratch operand']
  #allocation3 [shape = 'f32[16,128]{1,0:T(8,128)}', space=vmem, size = 0x2000, scoped, tag = 'scratch operand']
  #allocation4 [shape = 'f32[16,128]{1,0:T(8,128)}', space=vmem, size = 0x2000, scoped, tag = 'scratch operand']
  #allocation5 [shape = 'f32[16,128]{1,0:T(8,128)}', space=vmem, size = 0x2000, scoped, tag = 'scratch operand']
  %s0 = inlined_call_operand.hbm [shape: bf16[16,256], index: 0, kind: input, shape index: {}]
  %s1 = inlined_call_operand.hbm [shape: f32[16,128], index: 1, kind: input, shape index: {}]
  %s2 = inlined_call_operand.hbm [shape: bf16[256,384], index: 2, kind: input, shape index: {}]
  %s3 = inlined_call_operand.vmem [shape: f32[8,128], index: 3, kind: input, shape index: {}]
  %s4 = inlined_call_operand.hbm [shape: f32[16,128], index: 4, kind: output, shape index: {}]
  %s5 = sld [smem:[#allocation0]]
  $region85: #{tpu_custom_call.1} parent=0
    _
  %s7 = ssub.s32 1, %s5
  %s8 = scalar_select 0, %s7, %s5
  $region1: #{tpu_custom_call.1} parent=0
    #allocation6 [shape = 'u8[8192]{0}', space=vmem, size = 0x2000, scoped, tag = 'input window, operand 0']
    #allocation7 [shape = 's32[2]{0}', space=sflag, size = 0x8, scoped, tag = 'scoped memory for tpu_custom_call.1']
    #allocation8 [shape = 's32[2]{0}', space=sflag, size = 0x8, scoped, tag = 'scoped memory for tpu_custom_call.1']
    #allocation9 [shape = 'u8[8192]{0}', space=vmem, size = 0x2000, scoped, tag = 'input window, operand 1, single buffered']
    #allocation10 [shape = 's32[1]{0}', space=sflag, size = 0x4, scoped, tag = 'scoped memory for tpu_custom_call.1']
    #allocation11 [shape = 'u8[196608]{0}', space=vmem, size = 0x30000, scoped, tag = 'input window, operand 2']
    #allocation12 [shape = 'u8[8192]{0}', space=vmem, size = 0x2000, scoped, tag = 'output window, operand 0, single buffered']
    %9 = vsyncpa [#allocation7], 0
    %s10 = scalar_lea.sflag [#allocation7], 1
    %11 = vsyncpa %s10, 0
    %12 = vsyncpa [#allocation10], 0
    %13 = vsyncpa [#allocation8], 0
    loop: start=0, step=1, limit=4
    $region2: #{tpu_custom_call.1} parent=1 // loop_pre_header
      _
    $region3: #{tpu_custom_call.1} parent=1 // loop_header
      %s15 = sphi 0, %s19
      %p16 = scmp.ge.s32.totalorder %s15, 4
      %s22 = sphi 0, %s41
      %s23 = sphi 0, %s37
      %s24 = sphi 0, %s33
      %s25 = sphi 0, %s22
      %s26 = sphi 0, %s23
      %s27 = sphi 0, %s24
      %s28 = sphi 0, %s25
      %s29 = sphi 0, %s26
      %s30 = sphi 0, %s27
      %s46 = sphi 0, %s48
      %s49 = sphi 0, %s46
      %s50 = sphi 0, %s49
      %s66 = sphi 0, %s50
      %s74 = sphi 0, %s76
      %s77 = sphi 0, %s74
      %s78 = sphi 0, %s77
      %s94 = sphi 0, %s78
      %s102 = sphi 0, %s104
      %s105 = sphi 0, %s102
      %s106 = sphi 0, %s105
      %s122 = sphi 0, %s106
      %s128 = sphi 0, %s130
      %s131 = sphi 0, %s128
      %s132 = sphi 0, %s131
      %s148 = sphi 0, %s132
      %s156 = sphi 0, %s158
      %s159 = sphi 0, %s156
      %s160 = sphi 0, %s159
      %s176 = sphi 0, %s160
    $region4: #{tpu_custom_call.1} parent=1 // loop_header_branch
      %18 = sbr.rel (%p16) target = $region8
    $region5: #{tpu_custom_call.1} parent=1 // loop_body
      %s20 = ssub.s32 %s15, 1
      %s21 = ssub.s32 %s15, 2
      %s31 = sadd.s32 1, %s24
      %p32 = scmp.ge.s32.totalorder %s31, 2
      %s33 = scalar_select %p32, 0, %s31
      %s34 = sadd.s32 1, %s23
      %s35 = scalar_select %p32, %s34, %s23
      %p36 = scmp.ge.s32.totalorder %s35, 1
      %s37 = scalar_select %p36, 0, %s35
      %s38 = sadd.s32 1, %s22
      %s39 = scalar_select %p36, %s38, %s22
      %p40 = scmp.ge.s32.totalorder %s39, 1
      %s41 = scalar_select %p40, 0, %s39
      %s42 = ssub.s32 %s22, %s41
      %s43 = ssub.s32 %s24, %s33
      %s44 = sor.u32 %s42, %s43
      %p45 = scmp.eq.s32.totalorder %s44, 0
      %s47 = sadd.s32 %s46, 1
      %s48 = scalar_select %p45, %s46, %s47
      %p51 = pneg %p45
      %p52 = scmp.eq.s32.totalorder %s15, 1
      %p53 = por %p51, %p52
      %p54 = scmp.ne.s32.totalorder %s46, %s49
      %p55 = scmp.eq.s32.totalorder %s15, 0
      %p56 = por %p54, %p55
      %p57 = scmp.ne.s32.totalorder %s46, %s49
      %p58 = scmp.eq.s32.totalorder %s20, 1
      %p59 = por %p57, %p58
      %p60 = scmp.ne.s32.totalorder %s49, %s50
      %p61 = scmp.eq.s32.totalorder %s20, 0
      %p62 = por %p60, %p61
      %p63 = scmp.ne.s32.totalorder %s49, %s50
      %p64 = scmp.eq.s32.totalorder %s21, 1
      %p65 = por %p63, %p64
      %p67 = scmp.ne.s32.totalorder %s50, %s66
      %p68 = scmp.eq.s32.totalorder %s21, 0
      %p69 = por %p67, %p68
      %s70 = ssub.s32 %s22, %s41
      %s71 = ssub.s32 %s23, %s37
      %s72 = sor.u32 %s70, %s71
      %p73 = scmp.eq.s32.totalorder %s72, 0
      %s75 = sadd.s32 %s74, 1
      %s76 = scalar_select %p73, %s74, %s75
      %p79 = pneg %p73
      %p80 = scmp.eq.s32.totalorder %s15, 1
      %p81 = por %p79, %p80
      %p82 = scmp.ne.s32.totalorder %s74, %s77
      %p83 = scmp.eq.s32.totalorder %s15, 0
      %p84 = por %p82, %p83
      %p85 = scmp.ne.s32.totalorder %s74, %s77
      %p86 = scmp.eq.s32.totalorder %s20, 1
      %p87 = por %p85, %p86
      %p88 = scmp.ne.s32.totalorder %s77, %s78
      %p89 = scmp.eq.s32.totalorder %s20, 0
      %p90 = por %p88, %p89
      %p91 = scmp.ne.s32.totalorder %s77, %s78
      %p92 = scmp.eq.s32.totalorder %s21, 1
      %p93 = por %p91, %p92
      %p95 = scmp.ne.s32.totalorder %s78, %s94
      %p96 = scmp.eq.s32.totalorder %s21, 0
      %p97 = por %p95, %p96
      %s98 = ssub.s32 %s24, %s33
      %s99 = ssub.s32 %s23, %s37
      %s100 = sor.u32 %s98, %s99
      %p101 = scmp.eq.s32.totalorder %s100, 0
      %s103 = sadd.s32 %s102, 1
      %s104 = scalar_select %p101, %s102, %s103
      %p107 = pneg %p101
      %p108 = scmp.eq.s32.totalorder %s15, 1
      %p109 = por %p107, %p108
      %p110 = scmp.ne.s32.totalorder %s102, %s105
      %p111 = scmp.eq.s32.totalorder %s15, 0
      %p112 = por %p110, %p111
      %p113 = scmp.ne.s32.totalorder %s102, %s105
      %p114 = scmp.eq.s32.totalorder %s20, 1
      %p115 = por %p113, %p114
      %p116 = scmp.ne.s32.totalorder %s105, %s106
      %p117 = scmp.eq.s32.totalorder %s20, 0
      %p118 = por %p116, %p117
      %p119 = scmp.ne.s32.totalorder %s105, %s106
      %p120 = scmp.eq.s32.totalorder %s21, 1
      %p121 = por %p119, %p120
      %p123 = scmp.ne.s32.totalorder %s106, %s122
      %p124 = scmp.eq.s32.totalorder %s21, 0
      %p125 = por %p123, %p124
      %s126 = ssub.s32 %s23, %s37
      %p127 = scmp.eq.s32.totalorder %s126, 0
      %s129 = sadd.s32 %s128, 1
      %s130 = scalar_select %p127, %s128, %s129
      %p133 = pneg %p127
      %p134 = scmp.eq.s32.totalorder %s15, 1
      %p135 = por %p133, %p134
      %p136 = scmp.ne.s32.totalorder %s128, %s131
      %p137 = scmp.eq.s32.totalorder %s15, 0
      %p138 = por %p136, %p137
      %p139 = scmp.ne.s32.totalorder %s128, %s131
      %p140 = scmp.eq.s32.totalorder %s20, 1
      %p141 = por %p139, %p140
      %p142 = scmp.ne.s32.totalorder %s131, %s132
      %p143 = scmp.eq.s32.totalorder %s20, 0
      %p144 = por %p142, %p143
      %p145 = scmp.ne.s32.totalorder %s131, %s132
      %p146 = scmp.eq.s32.totalorder %s21, 1
      %p147 = por %p145, %p146
      %p149 = scmp.ne.s32.totalorder %s132, %s148
      %p150 = scmp.eq.s32.totalorder %s21, 0
      %p151 = por %p149, %p150
      %s152 = ssub.s32 %s22, %s41
      %s153 = ssub.s32 %s23, %s37
      %s154 = sor.u32 %s152, %s153
      %p155 = scmp.eq.s32.totalorder %s154, 0
      %s157 = sadd.s32 %s156, 1
      %s158 = scalar_select %p155, %s156, %s157
      %p161 = pneg %p155
      %p162 = scmp.eq.s32.totalorder %s15, 1
      %p163 = por %p161, %p162
      %p164 = scmp.ne.s32.totalorder %s156, %s159
      %p165 = scmp.eq.s32.totalorder %s15, 0
      %p166 = por %p164, %p165
      %p167 = scmp.ne.s32.totalorder %s156, %s159
      %p168 = scmp.eq.s32.totalorder %s20, 1
      %p169 = por %p167, %p168
      %p170 = scmp.ne.s32.totalorder %s159, %s160
      %p171 = scmp.eq.s32.totalorder %s20, 0
      %p172 = por %p170, %p171
      %p173 = scmp.ne.s32.totalorder %s159, %s160
      %p174 = scmp.eq.s32.totalorder %s21, 1
      %p175 = por %p173, %p174
      %p177 = scmp.ne.s32.totalorder %s160, %s176
      %p178 = scmp.eq.s32.totalorder %s21, 0
      %p179 = por %p177, %p178
      %p180 = scmp.le.s32.totalorder 1, %s15
      %p181 = scmp.lt.s32.totalorder %s15, 3
      %p182 = pnand %p180, %p181
      %p183 = pneg %p182
      // Predicated region
      $region9: #{tpu_custom_call.1} parent=5 // pred_check
        _
      $region10: #{tpu_custom_call.1} parent=5 // pred_check_branch
        %185 = sbr.rel (%p182) target = $region12
      $region11: #{tpu_custom_call.1} parent=5 // pred_region
        %s186 = ssub.s32 %s15, 1
        // Predicated region
        $region13: #{tpu_custom_call.1} parent=11 // pred_check
          %p187 = pneg %p90
        $region14: #{tpu_custom_call.1} parent=11 // pred_check_branch
          %189 = sbr.rel (%p187) target = $region16
        $region15: #{tpu_custom_call.1} parent=11 // pred_region
          %s190 = smul.u32 2, %s25
          %s192 = ssub.s32 256, 256
          %193 = vsyncadd [#allocation10], %s192
          %s194 = sadd.s32 %s26, %s190
          %s195 = smul.addr %s194, 128
          %s196 = scalar_lea.hbm %s1, %s195
          %s197 = sshll.u32 [#allocation9], 4
          %s198 = int_to_ptr.vmem [resolvable:$true] %s197
          %203 = dma.hbm_to_vmem [thread:$0]  %s196, 256, %s198, [#allocation10], 128, 128, 8
        $region16: #{tpu_custom_call.1} parent=11 // pred_fallthru
          _
        // Predicated region
        $region17: #{tpu_custom_call.1} parent=11 // pred_check
          %p204 = pneg %p144
        $region18: #{tpu_custom_call.1} parent=11 // pred_check_branch
          %206 = sbr.rel (%p204) target = $region20
        $region19: #{tpu_custom_call.1} parent=11 // pred_region
          %p207 = scmp.lt.s32.totalorder %s26, 0
          %s208 = scalar_select %p207, %s26, 0
          %s209 = smul.addr %s208, 8
          %s210 = scalar_lea.vmem %s3, %s209
        $region20: #{tpu_custom_call.1} parent=11 // pred_fallthru
          _
      $region12: #{tpu_custom_call.1} parent=5 // pred_fallthru
        _
      %p211 = scmp.lt.s32.totalorder %s15, 2
      // Predicated region
      $region21: #{tpu_custom_call.1} parent=5 // pred_check
        %p212 = pneg %p211
      $region22: #{tpu_custom_call.1} parent=5 // pred_check_branch
        %214 = sbr.rel (%p212) target = $region24
      $region23: #{tpu_custom_call.1} parent=5 // pred_region
        // Predicated region
        $region25: #{tpu_custom_call.1} parent=23 // pred_check
          %p215 = pneg %p56
        $region26: #{tpu_custom_call.1} parent=23 // pred_check_branch
          %217 = sbr.rel (%p215) target = $region28
        $region27: #{tpu_custom_call.1} parent=23 // pred_region
          %s218 = sand.u32 %s15, 1
          %s219 = scalar_lea.sflag [#allocation7], %s218
          %s220 = sand.u32 %s46, 1
          %s221 = smul.addr %s220, 8
          %s222 = scalar_lea.vmem [#allocation6], %s221
          %s223 = smul.u32 2, %s22
          %s225 = ssub.s32 128, 128
          %226 = vsyncadd %s219, %s225
          %s227 = smul.addr %s223, 2
          %s228 = sadd.s32 %s24, %s227
          %s229 = smul.addr %s228, 64
          %s230 = scalar_lea.hbm %s0, %s229
          %s231 = sshll.u32 %s222, 4
          %s232 = int_to_ptr.vmem [resolvable:$true] %s231
          %237 = dma.hbm_to_vmem [thread:$0]  %s230, 128, %s232, %s219, 128, 64, 4
        $region28: #{tpu_custom_call.1} parent=23 // pred_fallthru
          _
        // Predicated region
        $region29: #{tpu_custom_call.1} parent=23 // pred_check
          %p238 = pneg %p112
        $region30: #{tpu_custom_call.1} parent=23 // pred_check_branch
          %240 = sbr.rel (%p238) target = $region32
        $region31: #{tpu_custom_call.1} parent=23 // pred_region
          %s241 = sand.u32 %s15, 1
          %s242 = scalar_lea.sflag [#allocation7], %s241
          %s243 = sand.u32 %s102, 1
          %s244 = smul.addr %s243, 192
          %s245 = scalar_lea.vmem [#allocation11], %s244
          %s246 = smul.u32 16, %s24
          %s247 = smul.u32 3, %s23
          %s249 = ssub.s32 3072, 3072
          %250 = vsyncadd %s242, %s249
          %s251 = smul.addr %s246, 3
          %s252 = sadd.s32 %s247, %s251
          %s253 = smul.addr %s252, 64
          %s254 = scalar_lea.hbm %s2, %s253
          %s255 = sshll.u32 %s245, 4
          %s256 = int_to_ptr.vmem [resolvable:$true] %s255
          %261 = dma.hbm_to_vmem [thread:$0]  %s254, 3072, %s256, %s242, 192, 192, 12
        $region32: #{tpu_custom_call.1} parent=23 // pred_fallthru
          _
      $region24: #{tpu_custom_call.1} parent=5 // pred_fallthru
        _
      %p262 = scmp.le.s32.totalorder 1, %s15
      %p263 = scmp.lt.s32.totalorder %s15, 3
      %p264 = pnand %p262, %p263
      %p265 = pneg %p264
      // Predicated region
      $region33: #{tpu_custom_call.1} parent=5 // pred_check
        _
      $region34: #{tpu_custom_call.1} parent=5 // pred_check_branch
        %267 = sbr.rel (%p264) target = $region36
      $region35: #{tpu_custom_call.1} parent=5 // pred_region
        %s268 = ssub.s32 %s15, 1
        %s269 = sand.u32 %s20, 1
        %s270 = scalar_lea.sflag [#allocation7], %s269
        %s271 = sand.u32 %s49, 1
        %s272 = smul.addr %s271, 8
        %s273 = scalar_lea.vmem [#allocation6], %s272
        // Predicated region
        $region37: #{tpu_custom_call.1} parent=35 // pred_check
          %p274 = pneg %p62
        $region38: #{tpu_custom_call.1} parent=35 // pred_check_branch
          %276 = sbr.rel (%p274) target = $region40
        $region39: #{tpu_custom_call.1} parent=35 // pred_region
          %277 = dma.done %s270, 128
        $region40: #{tpu_custom_call.1} parent=35 // pred_fallthru
          _
        // Predicated region
        $region41: #{tpu_custom_call.1} parent=35 // pred_check
          %p278 = pneg %p90
        $region42: #{tpu_custom_call.1} parent=35 // pred_check_branch
          %280 = sbr.rel (%p278) target = $region44
        $region43: #{tpu_custom_call.1} parent=35 // pred_region
          %281 = dma.done [#allocation10], 256
        $region44: #{tpu_custom_call.1} parent=35 // pred_fallthru
          _
        %s282 = sand.u32 %s20, 1
        %s283 = scalar_lea.sflag [#allocation7], %s282
        %s284 = sand.u32 %s105, 1
        %s285 = smul.addr %s284, 192
        %s286 = scalar_lea.vmem [#allocation11], %s285
        // Predicated region
        $region45: #{tpu_custom_call.1} parent=35 // pred_check
          %p287 = pneg %p118
        $region46: #{tpu_custom_call.1} parent=35 // pred_check_branch
          %289 = sbr.rel (%p287) target = $region48
        $region47: #{tpu_custom_call.1} parent=35 // pred_region
          %290 = dma.done %s283, 3072
        $region48: #{tpu_custom_call.1} parent=35 // pred_fallthru
          _
        %s291 = sand.u32 %s20, 1
        %s292 = scalar_lea.sflag [#allocation7], %s291
        %s293 = sand.u32 %s49, 1
        %s294 = smul.addr %s293, 8
        %s295 = scalar_lea.vmem [#allocation6], %s294
        %p296 = pneg %p62
        %p297 = pneg %p59
        %p298 = pneg %p90
        %p299 = pneg %p87
        %s300 = sand.u32 %s20, 1
        %s301 = scalar_lea.sflag [#allocation7], %s300
        %s302 = sand.u32 %s105, 1
        %s303 = smul.addr %s302, 192
        %s304 = scalar_lea.vmem [#allocation11], %s303
        %p305 = pneg %p118
        %p306 = pneg %p115
        %p307 = scmp.lt.s32.totalorder %s26, 0
        %s308 = scalar_select %p307, %s26, 0
        %s309 = smul.addr %s308, 8
        %s310 = scalar_lea.vmem %s3, %s309
        %p311 = pneg %p144
        %p312 = pneg %p141
        %p313 = pneg %p172
        %p314 = pneg %p169
        %s315 = smul.u32 2, %s25
        %s316 = smul.u32 2, %s25
        %s317 = smul.u32 16, %s27
        %s318 = smul.u32 3, %s26
        %p319 = scmp.lt.s32.totalorder %s26, 0
        %s320 = scalar_select %p319, %s26, 0
        %s321 = smul.addr %s320, 8
        %s322 = scalar_lea.vmem %s3, %s321
        %s323 = smul.u32 2, %s25
        %v325 = vld [vmem:[%s273] sm:$0xf]
        %v326 = vld [vmem:[%s273 + $0x4] sm:$0xf]
        %v327 = vld [vmem:[%s286] sm:$0xff]
        %v328 = vld [vmem:[%s286 + $0x8] sm:$0xf]
        %v329 = vld [vmem:[%s286 + $0xc] sm:$0xff]
        %v330 = vld [vmem:[%s286 + $0x14] sm:$0xf]
        %v331 = vld [vmem:[%s286 + $0x18] sm:$0xff]
        %v332 = vld [vmem:[%s286 + $0x20] sm:$0xf]
        %v333 = vld [vmem:[%s286 + $0x24] sm:$0xff]
        %v334 = vld [vmem:[%s286 + $0x2c] sm:$0xf]
        %v335 = vld [vmem:[%s286 + $0x30] sm:$0xff]
        %v336 = vld [vmem:[%s286 + $0x38] sm:$0xf]
        %v337 = vld [vmem:[%s286 + $0x3c] sm:$0xff]
        %v338 = vld [vmem:[%s286 + $0x44] sm:$0xf]
        %v339 = vld [vmem:[%s286 + $0x48] sm:$0xff]
        %v340 = vld [vmem:[%s286 + $0x50] sm:$0xf]
        %v341 = vld [vmem:[%s286 + $0x54] sm:$0xff]
        %v342 = vld [vmem:[%s286 + $0x5c] sm:$0xf]
        %v343 = vld [vmem:[%s286 + $0x60] sm:$0xff]
        %v344 = vld [vmem:[%s286 + $0x68] sm:$0xf]
        %v345 = vld [vmem:[%s286 + $0x6c] sm:$0xff]
        %v346 = vld [vmem:[%s286 + $0x74] sm:$0xf]
        %v347 = vld [vmem:[%s286 + $0x78] sm:$0xff]
        %v348 = vld [vmem:[%s286 + $0x80] sm:$0xf]
        %v349 = vld [vmem:[%s286 + $0x84] sm:$0xff]
        %v350 = vld [vmem:[%s286 + $0x8c] sm:$0xf]
        %v351 = vld [vmem:[%s286 + $0x90] sm:$0xff]
        %v352 = vld [vmem:[%s286 + $0x98] sm:$0xf]
        %v353 = vld [vmem:[%s286 + $0x9c] sm:$0xff]
        %v354 = vld [vmem:[%s286 + $0xa4] sm:$0xf]
        %v355 = vld [vmem:[%s286 + $0xa8] sm:$0xff]
        %v356 = vld [vmem:[%s286 + $0xb0] sm:$0xf]
        %v357 = vld [vmem:[%s286 + $0xb4] sm:$0xff]
        %v358 = vld [vmem:[%s286 + $0xbc] sm:$0xf]
        %v361 = vunpack.c.l.b16 %v325
        %v362 = vunpack.c.l.b16 %v326
        %v363 = vpack.c.b16 %v362, %v361
        %v397 = vunpack.c.l.b16 %v327
        %v398 = vunpack.c.h.b16 %v327
        %v399 = vunpack.c.l.b16 %v328
        %v400 = vunpack.c.l.b16 %v329
        %v401 = vunpack.c.h.b16 %v329
        %v402 = vunpack.c.l.b16 %v330
        %v403 = vunpack.c.l.b16 %v331
        %v404 = vunpack.c.h.b16 %v331
        %v405 = vunpack.c.l.b16 %v332
        %v406 = vunpack.c.l.b16 %v333
        %v407 = vunpack.c.h.b16 %v333
        %v408 = vunpack.c.l.b16 %v334
        %v409 = vunpack.c.l.b16 %v335
        %v410 = vunpack.c.h.b16 %v335
        %v411 = vunpack.c.l.b16 %v336
        %v412 = vunpack.c.l.b16 %v337
        %v413 = vunpack.c.h.b16 %v337
        %v414 = vunpack.c.l.b16 %v338
        %v415 = vunpack.c.l.b16 %v339
        %v416 = vunpack.c.h.b16 %v339
        %v417 = vunpack.c.l.b16 %v340
        %v418 = vunpack.c.l.b16 %v341
        %v419 = vunpack.c.h.b16 %v341
        %v420 = vunpack.c.l.b16 %v342
        %v421 = vunpack.c.l.b16 %v343
        %v422 = vunpack.c.h.b16 %v343
        %v423 = vunpack.c.l.b16 %v344
        %v424 = vunpack.c.l.b16 %v345
        %v425 = vunpack.c.h.b16 %v345
        %v426 = vunpack.c.l.b16 %v346
        %v427 = vunpack.c.l.b16 %v347
        %v428 = vunpack.c.h.b16 %v347
        %v429 = vunpack.c.l.b16 %v348
        %v430 = vunpack.c.l.b16 %v349
        %v431 = vunpack.c.h.b16 %v349
        %v432 = vunpack.c.l.b16 %v350
        %v433 = vunpack.c.l.b16 %v351
        %v434 = vunpack.c.h.b16 %v351
        %v435 = vunpack.c.l.b16 %v352
        %v436 = vunpack.c.l.b16 %v353
        %v437 = vunpack.c.h.b16 %v353
        %v438 = vunpack.c.l.b16 %v354
        %v439 = vunpack.c.l.b16 %v355
        %v440 = vunpack.c.h.b16 %v355
        %v441 = vunpack.c.l.b16 %v356
        %v442 = vunpack.c.l.b16 %v357
        %v443 = vunpack.c.h.b16 %v357
        %v444 = vunpack.c.l.b16 %v358
        %v445 = vpack.c.b16 %v400, %v397
        %v446 = vpack.c.b16 %v401, %v398
        %v447 = vpack.c.b16 %v402, %v399
        %v448 = vpack.c.b16 %v406, %v403
        %v449 = vpack.c.b16 %v407, %v404
        %v450 = vpack.c.b16 %v408, %v405
        %v451 = vpack.c.b16 %v412, %v409
        %v452 = vpack.c.b16 %v413, %v410
        %v453 = vpack.c.b16 %v414, %v411
        %v454 = vpack.c.b16 %v418, %v415
        %v455 = vpack.c.b16 %v419, %v416
        %v456 = vpack.c.b16 %v420, %v417
        %v457 = vpack.c.b16 %v424, %v421
        %v458 = vpack.c.b16 %v425, %v422
        %v459 = vpack.c.b16 %v426, %v423
        %v460 = vpack.c.b16 %v430, %v427
        %v461 = vpack.c.b16 %v431, %v428
        %v462 = vpack.c.b16 %v432, %v429
        %v463 = vpack.c.b16 %v436, %v433
        %v464 = vpack.c.b16 %v437, %v434
        %v465 = vpack.c.b16 %v438, %v435
        %v466 = vpack.c.b16 %v442, %v439
        %v467 = vpack.c.b16 %v443, %v440
        %v468 = vpack.c.b16 %v444, %v441
        %493 = vmatprep.subr.bf16.mxu0 %v446
        %494 = vmatpush1.bf16.msra.mxu0 %v445
        %495 = vmatprep.subr.bf16.mxu0 %v449
        %496 = vmatpush1.bf16.msra.mxu0 %v448
        %497 = vmatprep.subr.bf16.mxu0 %v452
        %498 = vmatpush1.bf16.msra.mxu0 %v451
        %499 = vmatprep.subr.bf16.mxu0 %v455
        %500 = vmatpush1.bf16.msra.mxu0 %v454
        %501 = vmatprep.subr.bf16.mxu0 %v458
        %502 = vmatpush1.bf16.msra.mxu0 %v457
        %503 = vmatprep.subr.bf16.mxu0 %v461
        %504 = vmatpush1.bf16.msra.mxu0 %v460
        %505 = vmatprep.subr.bf16.mxu0 %v464
        %506 = vmatpush1.bf16.msra.mxu0 %v463
        %507 = vmatprep.subr.bf16.mxu0 %v467
        %508 = vmatpush1.bf16.msra.mxu0 %v466
        %509 = vmatprep.subr.bf16.mxu0 0
        %510 = vmatpush1.bf16.msra.mxu0 0
        %511 = vmatprep.subr.bf16.mxu0 0
        %512 = vmatpush1.bf16.msra.mxu0 0
        %513 = vmatprep.subr.bf16.mxu0 0
        %514 = vmatpush1.bf16.msra.mxu0 0
        %515 = vmatprep.subr.bf16.mxu0 0
        %516 = vmatpush1.bf16.msra.mxu0 0
        %517 = vmatprep.subr.bf16.mxu0 0
        %518 = vmatpush1.bf16.msra.mxu0 0
        %519 = vmatprep.subr.bf16.mxu0 0
        %520 = vmatpush1.bf16.msra.mxu0 0
        %521 = vmatprep.subr.bf16.mxu0 0
        %522 = vmatpush1.bf16.msra.mxu0 0
        %523 = vmatprep.subr.bf16.mxu0 0
        %524 = vmatpush1.bf16.msra.mxu0 0
        %525 = vmatprep.mubr.bf16.mxu0 0
        %526 = vmatmul.mubr.bf16.gmra.mrb[0].mxu0 %v363
        %v527 = vpop.f32.mrb[0].mxu0
        %v528 = vadd.f32 0.0, %v527
        %v529 = vpop.f32.mrb[0].mxu0
        %v530 = vadd.f32 0.0, %v529
        %v531 = vpop.f32.mrb[0].mxu0
        %v532 = vadd.f32 0.0, %v531
        %v533 = vpop.f32.mrb[0].mxu0
        %v534 = vadd.f32 0.0, %v533
        %535 = vdwg.mxu0
        %536 = vmatprep.subr.bf16.mxu0 0
        %537 = vmatpush1.bf16.msra.mxu0 %v447
        %538 = vmatprep.subr.bf16.mxu0 0
        %539 = vmatpush1.bf16.msra.mxu0 %v450
        %540 = vmatprep.subr.bf16.mxu0 0
        %541 = vmatpush1.bf16.msra.mxu0 %v453
        %542 = vmatprep.subr.bf16.mxu0 0
        %543 = vmatpush1.bf16.msra.mxu0 %v456
        %544 = vmatprep.subr.bf16.mxu0 0
        %545 = vmatpush1.bf16.msra.mxu0 %v459
        %546 = vmatprep.subr.bf16.mxu0 0
        %547 = vmatpush1.bf16.msra.mxu0 %v462
        %548 = vmatprep.subr.bf16.mxu0 0
        %549 = vmatpush1.bf16.msra.mxu0 %v465
        %550 = vmatprep.subr.bf16.mxu0 0
        %551 = vmatpush1.bf16.msra.mxu0 %v468
        %552 = vmatprep.subr.bf16.mxu0 0
        %553 = vmatpush1.bf16.msra.mxu0 0
        %554 = vmatprep.subr.bf16.mxu0 0
        %555 = vmatpush1.bf16.msra.mxu0 0
        %556 = vmatprep.subr.bf16.mxu0 0
        %557 = vmatpush1.bf16.msra.mxu0 0
        %558 = vmatprep.subr.bf16.mxu0 0
        %559 = vmatpush1.bf16.msra.mxu0 0
        %560 = vmatprep.subr.bf16.mxu0 0
        %561 = vmatpush1.bf16.msra.mxu0 0
        %562 = vmatprep.subr.bf16.mxu0 0
        %563 = vmatpush1.bf16.msra.mxu0 0
        %564 = vmatprep.subr.bf16.mxu0 0
        %565 = vmatpush1.bf16.msra.mxu0 0
        %566 = vmatprep.subr.bf16.mxu0 0
        %567 = vmatpush1.bf16.msra.mxu0 0
        %568 = vmatprep.mubr.bf16.mxu0 0
        %569 = vmatmul.mubr.bf16.gmra.mrb[0].mxu0 %v363
        %v570 = vpop.f32.mrb[0].mxu0
        %v571 = vadd.f32 0.0, %v570
        %v572 = vpop.f32.mrb[0].mxu0
        %v573 = vpop.f32.mrb[0].mxu0
        %v574 = vadd.f32 0.0, %v573
        %v575 = vpop.f32.mrb[0].mxu0
        %576 = vdwg.mxu0
        %p577 = scmp.eq.s32.totalorder %s27, 0
        // Predicated region
        $region49: #{tpu_custom_call.1} parent=35 // pred_check
          %p578 = pneg %p577
        $region50: #{tpu_custom_call.1} parent=35 // pred_check_branch
          %580 = sbr.rel (%p578) target = $region52
        $region51: #{tpu_custom_call.1} parent=35 // pred_region
          %581 = vst [vmem:[#allocation2] sm:$0xff] %v528
          %582 = vst [vmem:[#allocation2 + $0x8] sm:$0xff] %v532
          %583 = vst [vmem:[#allocation3] sm:$0xff] %v530
          %584 = vst [vmem:[#allocation3 + $0x8] sm:$0xff] %v534
          %585 = vst [vmem:[#allocation4] sm:$0xff] %v571
          %586 = vst [vmem:[#allocation4 + $0x8] sm:$0xff] %v574
        $region52: #{tpu_custom_call.1} parent=35 // pred_fallthru
          _
        %p587 = scmp.gt.s32.totalorder %s27, 0
        // Predicated region
        $region53: #{tpu_custom_call.1} parent=35 // pred_check
          %p588 = pneg %p587
        $region54: #{tpu_custom_call.1} parent=35 // pred_check_branch
          %590 = sbr.rel (%p588) target = $region56
        $region55: #{tpu_custom_call.1} parent=35 // pred_region
          %v591 = vld [vmem:[#allocation2] sm:$0xff]
          %v592 = vld [vmem:[#allocation2 + $0x8] sm:$0xff]
          %v593 = vadd.f32 %v591, %v528
          %v594 = vadd.f32 %v592, %v532
          %595 = vst [vmem:[#allocation2] sm:$0xff] %v593
          %596 = vst [vmem:[#allocation2 + $0x8] sm:$0xff] %v594
          %v597 = vld [vmem:[#allocation3] sm:$0xff]
          %v598 = vld [vmem:[#allocation3 + $0x8] sm:$0xff]
          %v599 = vadd.f32 %v597, %v530
          %v600 = vadd.f32 %v598, %v534
          %601 = vst [vmem:[#allocation3] sm:$0xff] %v599
          %602 = vst [vmem:[#allocation3 + $0x8] sm:$0xff] %v600
        $region56: #{tpu_custom_call.1} parent=35 // pred_fallthru
          _
        %p603 = scmp.lt.s32.totalorder %s27, 1
        %p604 = pnand %p587, %p603
        %p605 = pneg %p604
        // Predicated region
        $region57: #{tpu_custom_call.1} parent=35 // pred_check
          _
        $region58: #{tpu_custom_call.1} parent=35 // pred_check_branch
          %607 = sbr.rel (%p604) target = $region60
        $region59: #{tpu_custom_call.1} parent=35 // pred_region
          %v608 = vld [vmem:[#allocation4] sm:$0xff]
          %v609 = vld [vmem:[#allocation4 + $0x8] sm:$0xff]
          %v610 = vadd.f32 %v608, %v571
          %v611 = vadd.f32 %v609, %v574
          %612 = vst [vmem:[#allocation4] sm:$0xff] %v610
          %613 = vst [vmem:[#allocation4 + $0x8] sm:$0xff] %v611
        $region60: #{tpu_custom_call.1} parent=35 // pred_fallthru
          _
        %p614 = scmp.eq.s32.totalorder %s27, 1
        // Predicated region
        $region61: #{tpu_custom_call.1} parent=35 // pred_check
          %p615 = pneg %p614
        $region62: #{tpu_custom_call.1} parent=35 // pred_check_branch
          %617 = sbr.rel (%p615) target = $region64
        $region63: #{tpu_custom_call.1} parent=35 // pred_region
          %618 = vst [vmem:[#allocation5] sm:$0xff] %v571
          %619 = vst [vmem:[#allocation5 + $0x8] sm:$0xff] %v574
        $region64: #{tpu_custom_call.1} parent=35 // pred_fallthru
          _
        %p620 = scmp.gt.s32.totalorder %s27, 1
        // Predicated region
        $region65: #{tpu_custom_call.1} parent=35 // pred_check
          %p621 = pneg %p620
        $region66: #{tpu_custom_call.1} parent=35 // pred_check_branch
          %623 = sbr.rel (%p621) target = $region68
        $region67: #{tpu_custom_call.1} parent=35 // pred_region
          %v624 = vld [vmem:[#allocation5] sm:$0xff]
          %v625 = vld [vmem:[#allocation5 + $0x8] sm:$0xff]
          %v626 = vadd.f32 %v624, %v571
          %v627 = vadd.f32 %v625, %v574
          %628 = vst [vmem:[#allocation5] sm:$0xff] %v626
          %629 = vst [vmem:[#allocation5 + $0x8] sm:$0xff] %v627
        $region68: #{tpu_custom_call.1} parent=35 // pred_fallthru
          _
        // Predicated region
        $region69: #{tpu_custom_call.1} parent=35 // pred_check
          %p630 = pneg %p614
        $region70: #{tpu_custom_call.1} parent=35 // pred_check_branch
          %632 = sbr.rel (%p630) target = $region72
        $region71: #{tpu_custom_call.1} parent=35 // pred_region
          %v633 = vld [vmem:[%s322] sm:$0xff]
          %v634 = vld [vmem:[#allocation2] sm:$0xff]
          %v635 = vld [vmem:[#allocation2 + $0x8] sm:$0xff]
          %v636 = vlaneseq
          %v637 = vshrl.u32 %v636, 7
          %v638 = vsub.s32 0, %v637
          %v639 = vrot.slane %v633, %v638
          %v640 = vadd.f32 %v634, %v639
          %v641 = vadd.f32 %v635, %v639
          %v642 = vxor.u32 %v640, 2147483648
          %v643 = vxor.u32 %v641, 2147483648
          %v644 = vmul.f32 %v642, 1.442695
          %v645 = vpow.pop %v644
          %v646 = vmul.f32 %v643, 1.442695
          %v647 = vpow.pop %v646
          %v648 = vadd.f32 %v645, 1.0
          %v649 = vadd.f32 %v647, 1.0
          %v650 = vrcp.pop %v648
          %v651 = vmul.f32 1.0, %v650
          %v652 = vrcp.pop %v649
          %v653 = vmul.f32 1.0, %v652
          %v654 = vld [vmem:[#allocation3] sm:$0xff]
          %v655 = vld [vmem:[#allocation3 + $0x8] sm:$0xff]
          %v656 = vlaneseq
          %v657 = vshrl.u32 %v656, 7
          %v658 = vsub.s32 1, %v657
          %v659 = vrot.slane %v633, %v658
          %v660 = vadd.f32 %v654, %v659
          %v661 = vadd.f32 %v655, %v659
          %v662 = vxor.u32 %v660, 2147483648
          %v663 = vxor.u32 %v661, 2147483648
          %v664 = vmul.f32 %v662, 1.442695
          %v665 = vpow.pop %v664
          %v666 = vmul.f32 %v663, 1.442695
          %v667 = vpow.pop %v666
          %v668 = vadd.f32 %v665, 1.0
          %v669 = vadd.f32 %v667, 1.0
          %v670 = vrcp.pop %v668
          %v671 = vmul.f32 1.0, %v670
          %v672 = vrcp.pop %v669
          %v673 = vmul.f32 1.0, %v672
          %v674 = vld [vmem:[#allocation4] sm:$0xff]
          %v675 = vld [vmem:[#allocation4 + $0x8] sm:$0xff]
          %v676 = vlaneseq
          %v677 = vshrl.u32 %v676, 7
          %v678 = vsub.s32 2, %v677
          %v679 = vrot.slane %v633, %v678
          %v680 = vadd.f32 %v674, %v679
          %v681 = vadd.f32 %v675, %v679
          %v682 = vld [vmem:[#allocation5] sm:$0xff]
          %v683 = vld [vmem:[#allocation5 + $0x8] sm:$0xff]
          %v684 = vlaneseq
          %v685 = vshrl.u32 %v684, 7
          %v686 = vsub.s32 3, %v685
          %v687 = vrot.slane %v633, %v686
          %v688 = vadd.f32 %v682, %v687
          %v689 = vadd.f32 %v683, %v687
          %v690 = vmul.f32 %v651, %v688
          %v691 = vmul.f32 %v653, %v689
          %v692 = vadd.f32 %v680, %v690
          %v693 = vadd.f32 %v681, %v691
          %v694 = vtanh.pop %v692
          %v695 = vtanh.pop %v693
          %v696 = vld [vmem:[#allocation9] sm:$0xff]
          %v697 = vld [vmem:[#allocation9 + $0x8] sm:$0xff]
          %v698 = vsub.f32 1.0, %v671
          %v699 = vsub.f32 1.0, %v673
          %v700 = vmul.f32 %v698, %v694
          %v701 = vmul.f32 %v699, %v695
          %v702 = vmul.f32 %v671, %v696
          %v703 = vmul.f32 %v673, %v697
          %v704 = vadd.f32 %v700, %v702
          %v705 = vadd.f32 %v701, %v703
          %706 = vst [vmem:[#allocation12] sm:$0xff] %v704
          %707 = vst [vmem:[#allocation12 + $0x8] sm:$0xff] %v705
        $region72: #{tpu_custom_call.1} parent=35 // pred_fallthru
          _
        // Predicated region
        $region73: #{tpu_custom_call.1} parent=35 // pred_check
          %p708 = pneg %p169
        $region74: #{tpu_custom_call.1} parent=35 // pred_check_branch
          %710 = sbr.rel (%p708) target = $region76
        $region75: #{tpu_custom_call.1} parent=35 // pred_region
          %s711 = smul.u32 2, %s25
          %s713 = ssub.s32 256, 256
          %714 = vsyncadd [#allocation8], %s713
          %s715 = sadd.s32 %s26, %s711
          %s716 = smul.addr %s715, 128
          %s717 = scalar_lea.hbm %s4, %s716
          %s718 = sshll.u32 [#allocation12], 4
          %s719 = int_to_ptr.vmem [resolvable:$true] %s718
          %724 = dma.vmem_to_hbm [thread:$0]  %s719, 256, %s717, [#allocation8], 128, 128, 8
        $region76: #{tpu_custom_call.1} parent=35 // pred_fallthru
          _
        // Predicated region
        $region77: #{tpu_custom_call.1} parent=35 // pred_check
          %p725 = pneg %p169
        $region78: #{tpu_custom_call.1} parent=35 // pred_check_branch
          %727 = sbr.rel (%p725) target = $region80
        $region79: #{tpu_custom_call.1} parent=35 // pred_region
          %728 = dma.done [#allocation8], 256
        $region80: #{tpu_custom_call.1} parent=35 // pred_fallthru
          _
      $region36: #{tpu_custom_call.1} parent=5 // pred_fallthru
        _
      %p729 = scmp.le.s32.totalorder 2, %s15
      // Predicated region
      $region81: #{tpu_custom_call.1} parent=5 // pred_check
        %p730 = pneg %p729
      $region82: #{tpu_custom_call.1} parent=5 // pred_check_branch
        %732 = sbr.rel (%p730) target = $region84
      $region83: #{tpu_custom_call.1} parent=5 // pred_region
        %s733 = ssub.s32 %s15, 2
      $region84: #{tpu_custom_call.1} parent=5 // pred_fallthru
        _
    $region6: #{tpu_custom_call.1} parent=1 // loop_footer
      %s19 = sadd.s32 1, %s15
    $region7: #{tpu_custom_call.1} parent=1 // loop_footer_branch
      %14 = sbr.rel target = $region3
    $region8: #{tpu_custom_call.1} parent=1 // loop_exit
      _
    %734 = vsyncpa [#allocation7], 1
    %s735 = scalar_lea.sflag [#allocation7], 1
    %736 = vsyncpa %s735, 1
    %737 = vsyncpa [#allocation10], 1
    %738 = vsyncpa [#allocation8], 1
    %s739 = scalar_lea.sflag [#allocation8], 1
    %740 = vsyncpa %s739, 1

</llo_original>
